<compile_context>
chip_gen: v5e
topology: v5e:2x2
jax: 0.10.0
libtpu: 0.0.40
codegen_flags: <defaults>
</compile_context>

<pallas_src>
import functools

import jax
import jax.numpy as jnp
from jax.experimental import pallas as pl
from jax.experimental.pallas import tpu as pltpu

# ----------------------------- configuration ---------------------------------
INPUT_DIM = 16
CONV_FILTERS = [8, 8, 8, 8]          # conv i has kernel_size = 2*i+1, padding = i
INTERMEDIATE_DIM = 32
HIGHWAY_LAYERS = 2
FF_LAYERS = 2
MAX_POOL_WINDOW = 5
NEG = -1e30                          # pad value for ceil-mode max pooling


def _layer_norm(x, g, b, eps=1e-5):
    mu = jnp.mean(x, axis=-1, keepdims=True)
    xc = x - mu
    var = jnp.mean(xc * xc, axis=-1, keepdims=True)
    return xc * jax.lax.rsqrt(var + eps) * g + b


# ------------------------------ Pallas kernel ---------------------------------
def _fused_kernel(x_ref, m_ref, wcat_ref, hw_w_ref, ff_w1_ref, ff_w2_ref,
                  vecd_ref, vec2d_ref, out_ref, *, L, Lp, W, maxpad, n_hw, n_ff):
    """One batch element: conv bank (folded) -> ReLU -> MaxPool -> Highways ->
    ReLU/LayerNorm -> Transformer FF stack."""
    Cin = x_ref.shape[2]
    D = out_ref.shape[2]
    n_shift = 2 * maxpad + 1

    # ---- mask + zero "same" padding (in registers, no HBM intermediates) ----
    xm = x_ref[0] * m_ref[0]                                   # (L, Cin)
    zpad = jnp.zeros((maxpad, Cin), jnp.float32)
    xp = jnp.concatenate([zpad, xm, zpad], axis=0)             # (L + 2*maxpad, Cin)

    # ---- conv bank + after_cnn as a single im2col matmul --------------------
    # column block s corresponds to shift (s - maxpad); weights are host-fused.
    cols = jnp.concatenate([xp[s:s + L, :] for s in range(n_shift)], axis=1)
    h = jnp.dot(cols, wcat_ref[...], preferred_element_type=jnp.float32)
    h = jnp.maximum(h + vecd_ref[0:1], 0.0)                    # fused bias + ReLU

    # ---- ceil-mode MaxPool1d(W, W) ------------------------------------------
    x = jnp.concatenate(
        [jnp.max(h[j * W:min((j + 1) * W, L), :], axis=0, keepdims=True)
         for j in range(Lp)], axis=0)                          # (Lp, D)

    # ---- Highway stack (proj | gate fused into one matmul per layer) --------
    for i in range(n_hw):
        y = (jnp.dot(x, hw_w_ref[i], preferred_element_type=jnp.float32)
             + vec2d_ref[i:i + 1])                             # (Lp, 2D)
        proj = jnp.maximum(y[:, :D], 0.0)
        gate = jax.nn.sigmoid(y[:, D:])
        x = gate * proj + (1.0 - gate) * x

    # ---- after_highways: ReLU + LayerNorm ------------------------------------
    x = _layer_norm(jnp.maximum(x, 0.0), vecd_ref[1:2], vecd_ref[2:3])

    # ---- Transformer feed-forward layers -------------------------------------
    for i in range(n_ff):
        hmid = jnp.maximum(
            jnp.dot(x, ff_w1_ref[i], preferred_element_type=jnp.float32)
            + vec2d_ref[n_hw + i:n_hw + i + 1], 0.0)           # (Lp, 2D)
        hout = (jnp.dot(hmid, ff_w2_ref[i], preferred_element_type=jnp.float32)
                + vecd_ref[3 + 3 * i:4 + 3 * i])               # (Lp, D)
        x = _layer_norm(hout + x,
                        vecd_ref[4 + 3 * i:5 + 3 * i],
                        vecd_ref[5 + 3 * i:6 + 3 * i])

    out_ref[0] = x


def _full_spec(a):
    zeros = (0,) * a.ndim
    return pl.BlockSpec(a.shape, lambda b, _z=zeros: _z)


# --------------------- host-side weight fusion (linear identity) --------------
def _fuse_conv_weights(params):
    """Fold the 1x1 after_cnn conv into the conv bank and merge taps by shift.

    Returns wcat ((2*maxpad+1)*Cin, D) stacked by shift -maxpad..maxpad, and the
    fused bias (D,), all in f32.
    """
    maxpad = len(CONV_FILTERS) - 1
    Cin, D = INPUT_DIM, INTERMEDIATE_DIM
    wa = params["after_cnn_w"][:, :, 0].astype(jnp.float32)    # (D, sum(F))
    bias = params["after_cnn_b"].astype(jnp.float32)           # (D,)
    n_shift = 2 * maxpad + 1
    w_shift = [jnp.zeros((Cin, D), jnp.float32) for _ in range(n_shift)]
    off = 0
    for i, f in enumerate(CONV_FILTERS):
        K, p = 2 * i + 1, i
        cw = params[f"conv{i}_w"].astype(jnp.float32)          # (f, Cin, K)
        cb = params[f"conv{i}_b"].astype(jnp.float32)          # (f,)
        wa_slice = wa[:, off:off + f]                          # (D, f)
        bias = bias + wa_slice @ cb
        for t in range(K):
            s = t - p                                          # shift in [-p, p]
            w_shift[s + maxpad] = w_shift[s + maxpad] + cw[:, :, t].T @ wa_slice.T
        off += f
    return jnp.concatenate(w_shift, axis=0), bias              # (n_shift*Cin, D)


# ------------------------------- wrapper --------------------------------------
def lee_style_char_proc(embedded_chars, mask, params):
    """embedded_chars: (B, L, INPUT_DIM) f32, mask: (B, L) f32 in {0,1}."""
    B, L, Cin = embedded_chars.shape
    maxpad = len(CONV_FILTERS) - 1
    D = INTERMEDIATE_DIM
    W = MAX_POOL_WINDOW
    Lp = -(-L // W)

    # ---- host-side weight packing (done once under jit / ahead of time) -----
    wcat, bconv = _fuse_conv_weights(params)                   # (7*Cin, D), (D,)
    hw_w = jnp.stack([
        jnp.concatenate([params[f"hw{i}_proj_w"][:, :, 0].T,
                         params[f"hw{i}_trans_w"][:, :, 0].T], axis=1)
        for i in range(HIGHWAY_LAYERS)])                       # (n_hw, D, 2D)
    ff_w1 = jnp.stack([params[f"ff{i}_w1"].T for i in range(FF_LAYERS)])  # (n_ff, D, 2D)
    ff_w2 = jnp.stack([params[f"ff{i}_w2"].T for i in range(FF_LAYERS)])  # (n_ff, 2D, D)

    # D-wide vectors: [conv bias, ah_ln_g, ah_ln_b, (ff_b2, ff_ln_g, ff_ln_b)*]
    vec_d = jnp.stack(
        [bconv, params["ah_ln_g"], params["ah_ln_b"]]
        + sum([[params[f"ff{i}_b2"], params[f"ff{i}_ln_g"], params[f"ff{i}_ln_b"]]
               for i in range(FF_LAYERS)], []))                # (3+3*n_ff, D)
    # 2D-wide vectors: [hw biases (proj|gate), ff first-layer biases]
    vec_2d = jnp.stack(
        [jnp.concatenate([params[f"hw{i}_proj_b"], params[f"hw{i}_trans_b"]])
         for i in range(HIGHWAY_LAYERS)]
        + [params[f"ff{i}_b1"] for i in range(FF_LAYERS)])     # (n_hw+n_ff, 2D)

    weights = [wcat, hw_w, ff_w1, ff_w2, vec_d, vec_2d]
    mask3 = mask[:, :, None]                                   # (B, L, 1)

    out = pl.pallas_call(
        functools.partial(_fused_kernel, L=L, Lp=Lp, W=W, maxpad=maxpad,
                          n_hw=HIGHWAY_LAYERS, n_ff=FF_LAYERS),
        out_shape=jax.ShapeDtypeStruct((B, Lp, D), jnp.float32),
        grid=(B,),
        in_specs=[pl.BlockSpec((1, L, Cin), lambda b: (b, 0, 0)),
                  pl.BlockSpec((1, L, 1), lambda b: (b, 0, 0))]
                 + [_full_spec(w) for w in weights],
        out_specs=pl.BlockSpec((1, Lp, D), lambda b: (b, 0, 0)),
        compiler_params=pltpu.CompilerParams(dimension_semantics=("parallel",)),
    )(embedded_chars, mask3, *weights)

    # mask max-pool (ceil mode): lane-width-1 result, intentionally kept out of
    # the Pallas kernel (worst-case masked-store pattern); trivial in XLA.
    mp = jnp.pad(mask, ((0, 0), (0, Lp * W - L)), constant_values=NEG)
    shrunk_mask = jnp.max(mp.reshape(B, Lp, W), axis=-1)
    return out, shrunk_mask


# --------------------------- deterministic params ------------------------------
def init_params(key):
    params = {}
    ki = iter(jax.random.split(key, 64))
    nrm = lambda k, shape: 0.1 * jax.random.normal(k, shape, jnp.float32)
    Csum = sum(CONV_FILTERS)
    D = INTERMEDIATE_DIM
    for i, f in enumerate(CONV_FILTERS):                 # nn.Conv1d(in, f, 2i+1)
        params[f"conv{i}_w"] = nrm(next(ki), (f, INPUT_DIM, 2 * i + 1))
        params[f"conv{i}_b"] = nrm(next(ki), (f,))
    params["after_cnn_w"] = nrm(next(ki), (D, Csum, 1))  # nn.Conv1d(Csum, D, 1)
    params["after_cnn_b"] = nrm(next(ki), (D,))
    for i in range(HIGHWAY_LAYERS):
        params[f"hw{i}_proj_w"] = nrm(next(ki), (D, D, 1))
        params[f"hw{i}_proj_b"] = nrm(next(ki), (D,))
        params[f"hw{i}_trans_w"] = nrm(next(ki), (D, D, 1))
        params[f"hw{i}_trans_b"] = jnp.full((D,), -2.0, jnp.float32)  # bias.fill_(-2.0)
    params["ah_ln_g"] = jnp.ones((D,), jnp.float32)
    params["ah_ln_b"] = jnp.zeros((D,), jnp.float32)
    for i in range(FF_LAYERS):
        params[f"ff{i}_w1"] = nrm(next(ki), (2 * D, D))   # nn.Linear(D, 2D)
        params[f"ff{i}_b1"] = nrm(next(ki), (2 * D,))
        params[f"ff{i}_w2"] = nrm(next(ki), (D, 2 * D))   # nn.Linear(2D, D)
        params[f"ff{i}_b2"] = nrm(next(ki), (D,))
        params[f"ff{i}_ln_g"] = jnp.ones((D,), jnp.float32)
        params[f"ff{i}_ln_b"] = jnp.zeros((D,), jnp.float32)
    return params


# ------------------------------ pure-JAX reference -----------------------------
def reference(embedded_chars, mask, params):
    B, L, _ = embedded_chars.shape
    D, W = INTERMEDIATE_DIM, MAX_POOL_WINDOW
    Lp = -(-L // W)
    x = embedded_chars * mask[:, :, None]
    outs = []
    for i, f in enumerate(CONV_FILTERS):
        K, p = 2 * i + 1, i
        w, b = params[f"conv{i}_w"], params[f"conv{i}_b"]
        xp = jnp.pad(x, ((0, 0), (p, p), (0, 0)))
        o = jnp.zeros((B, L, f), jnp.float32)
        for t in range(K):
            o = o + jnp.einsum("blc,fc->blf", xp[:, t:t + L, :], w[:, :, t])
        outs.append(o + b)
    cat = jnp.concatenate(outs, axis=-1)
    h = jnp.maximum(cat @ params["after_cnn_w"][:, :, 0].T
                    + params["after_cnn_b"], 0.0)
    hp = jnp.pad(h, ((0, 0), (0, Lp * W - L), (0, 0)), constant_values=NEG)
    xh = jnp.max(hp.reshape(B, Lp, W, D), axis=2)
    for i in range(HIGHWAY_LAYERS):
        proj = jnp.maximum(xh @ params[f"hw{i}_proj_w"][:, :, 0].T
                           + params[f"hw{i}_proj_b"], 0.0)
        gate = jax.nn.sigmoid(xh @ params[f"hw{i}_trans_w"][:, :, 0].T
                              + params[f"hw{i}_trans_b"])
        xh = gate * proj + (1.0 - gate) * xh
    xh = _layer_norm(jnp.maximum(xh, 0.0), params["ah_ln_g"], params["ah_ln_b"])
    for i in range(FF_LAYERS):
        hf = jnp.maximum(xh @ params[f"ff{i}_w1"].T + params[f"ff{i}_b1"], 0.0)
        hf = hf @ params[f"ff{i}_w2"].T + params[f"ff{i}_b2"]
        xh = _layer_norm(hf + xh, params[f"ff{i}_ln_g"], params[f"ff{i}_ln_b"])
    mp = jnp.pad(mask, ((0, 0), (0, Lp * W - L)), constant_values=NEG)
    mpool = jnp.max(mp.reshape(B, Lp, W), axis=-1)
    return xh, mpool


# ------------------------------------ main -------------------------------------
if __name__ == "__main__":
    B, L = 2, 16
    key = jax.random.PRNGKey(0)
    k_x, k_p = jax.random.split(key)
    embedded_chars = jax.random.normal(k_x, (B, L, INPUT_DIM), jnp.float32)
    lengths = jnp.array([16, 12])
    mask = (jnp.arange(L)[None, :] < lengths[:, None]).astype(jnp.float32)
    params = init_params(k_p)

    fwd = jax.jit(lee_style_char_proc)
    out, shrunk_mask = fwd(embedded_chars, mask, params)
    out = jax.block_until_ready(out)
    shrunk_mask = jax.block_until_ready(shrunk_mask)

    ref_out, ref_mask = reference(embedded_chars, mask, params)
    Lp = -(-L // MAX_POOL_WINDOW)
    assert out.shape == (B, Lp, INTERMEDIATE_DIM)
    assert shrunk_mask.shape == (B, Lp)
    assert jnp.allclose(out, ref_out, atol=2e-3, rtol=2e-3), \
        float(jnp.max(jnp.abs(out - ref_out)))
    assert jnp.allclose(shrunk_mask, ref_mask, atol=1e-6)
    print("KERNEL_OK")
</pallas_src>

<mosaic_0001>
module attributes {stable_mosaic.version = 11 : i64} {
  func.func @_fused_kernel(%arg0: i32, %arg1: memref<1x16x16xf32, #tpu.memory_space<vmem>>, %arg2: memref<1x16x1xf32, #tpu.memory_space<vmem>>, %arg3: memref<112x32xf32, #tpu.memory_space<vmem>>, %arg4: memref<2x32x64xf32, #tpu.memory_space<vmem>>, %arg5: memref<2x32x64xf32, #tpu.memory_space<vmem>>, %arg6: memref<2x64x32xf32, #tpu.memory_space<vmem>>, %arg7: memref<9x32xf32, #tpu.memory_space<vmem>>, %arg8: memref<4x64xf32, #tpu.memory_space<vmem>>, %arg9: memref<1x4x32xf32, #tpu.memory_space<vmem>>) attributes {dimension_semantics = [#tpu.dimension_semantics<parallel>], iteration_bounds = array<i64: 2>, scalar_prefetch = 0 : i64, scratch_operands = 0 : i64, tpu.core_type = #tpu.core_type<tc>, window_params = [{transform_indices = @transform_0, window_bounds = array<i64: 1, 16, 16>}, {transform_indices = @transform_1, window_bounds = array<i64: 1, 16, 1>}, {pipeline_mode = #tpu.pipeline_mode<synchronous>, transform_indices = @transform_2, window_bounds = array<i64: 112, 32>}, {pipeline_mode = #tpu.pipeline_mode<synchronous>, transform_indices = @transform_3, window_bounds = array<i64: 2, 32, 64>}, {pipeline_mode = #tpu.pipeline_mode<synchronous>, transform_indices = @transform_4, window_bounds = array<i64: 2, 32, 64>}, {pipeline_mode = #tpu.pipeline_mode<synchronous>, transform_indices = @transform_5, window_bounds = array<i64: 2, 64, 32>}, {pipeline_mode = #tpu.pipeline_mode<synchronous>, transform_indices = @transform_6, window_bounds = array<i64: 9, 32>}, {pipeline_mode = #tpu.pipeline_mode<synchronous>, transform_indices = @transform_7, window_bounds = array<i64: 4, 64>}, {transform_indices = @transform_8, window_bounds = array<i64: 1, 4, 32>}]} {
    %c0 = arith.constant 0 : index
    %c0_0 = arith.constant 0 : index
    %c0_1 = arith.constant 0 : index
    %0 = vector.load %arg1[%c0, %c0_0, %c0_1] : memref<1x16x16xf32, #tpu.memory_space<vmem>>, vector<1x16x16xf32>
    %1 = vector.shape_cast %0 : vector<1x16x16xf32> to vector<16x16xf32>
    %c0_2 = arith.constant 0 : index
    %c0_3 = arith.constant 0 : index
    %c0_4 = arith.constant 0 : index
    %2 = vector.load %arg2[%c0_2, %c0_3, %c0_4] : memref<1x16x1xf32, #tpu.memory_space<vmem>>, vector<1x16x1xf32>
    %3 = vector.shape_cast %2 : vector<1x16x1xf32> to vector<16x1xf32>
    %4 = vector.broadcast %3 : vector<16x1xf32> to vector<16x16xf32>
    %5 = arith.mulf %1, %4 : vector<16x16xf32>
    %cst = arith.constant 0.000000e+00 : f32
    %6 = vector.broadcast %cst : f32 to vector<3x16xf32>
    %7 = tpu.concatenate %6, %5, %6 in 0 : vector<3x16xf32>, vector<16x16xf32>, vector<3x16xf32> -> vector<22x16xf32>
    %8 = vector.extract_strided_slice %7 {offsets = [0, 0], sizes = [16, 16], strides = [1, 1]} : vector<22x16xf32> to vector<16x16xf32>
    %9 = vector.extract_strided_slice %7 {offsets = [1, 0], sizes = [16, 16], strides = [1, 1]} : vector<22x16xf32> to vector<16x16xf32>
    %10 = vector.extract_strided_slice %7 {offsets = [2, 0], sizes = [16, 16], strides = [1, 1]} : vector<22x16xf32> to vector<16x16xf32>
    %11 = vector.extract_strided_slice %7 {offsets = [3, 0], sizes = [16, 16], strides = [1, 1]} : vector<22x16xf32> to vector<16x16xf32>
    %12 = vector.extract_strided_slice %7 {offsets = [4, 0], sizes = [16, 16], strides = [1, 1]} : vector<22x16xf32> to vector<16x16xf32>
    %13 = vector.extract_strided_slice %7 {offsets = [5, 0], sizes = [16, 16], strides = [1, 1]} : vector<22x16xf32> to vector<16x16xf32>
    %14 = vector.extract_strided_slice %7 {offsets = [6, 0], sizes = [16, 16], strides = [1, 1]} : vector<22x16xf32> to vector<16x16xf32>
    %15 = tpu.concatenate %8, %9, %10, %11, %12, %13, %14 in 1 : vector<16x16xf32>, vector<16x16xf32>, vector<16x16xf32>, vector<16x16xf32>, vector<16x16xf32>, vector<16x16xf32>, vector<16x16xf32> -> vector<16x112xf32>
    %c0_5 = arith.constant 0 : index
    %c0_6 = arith.constant 0 : index
    %16 = vector.load %arg3[%c0_5, %c0_6] : memref<112x32xf32, #tpu.memory_space<vmem>>, vector<112x32xf32>
    %cst_7 = arith.constant dense<0.000000e+00> : vector<16x32xf32>
    %17 = tpu.matmul %15, %16, %cst_7 {dimension_numbers = #tpu.dot_dimension_numbers<[1], [0], [0], [1], [0, 0, 1, 1], [], []>} : vector<16x112xf32>, vector<112x32xf32>, vector<16x32xf32> -> vector<16x32xf32>
    %c0_8 = arith.constant 0 : index
    %c0_9 = arith.constant 0 : index
    %18 = vector.load %arg7[%c0_8, %c0_9] : memref<9x32xf32, #tpu.memory_space<vmem>>, vector<1x32xf32>
    %19 = vector.broadcast %18 : vector<1x32xf32> to vector<16x32xf32>
    %20 = arith.addf %17, %19 : vector<16x32xf32>
    %cst_10 = arith.constant 0.000000e+00 : f32
    %21 = vector.broadcast %cst_10 : f32 to vector<16x32xf32>
    %22 = arith.maximumf %20, %21 : vector<16x32xf32>
    %23 = vector.extract_strided_slice %22 {offsets = [0, 0], sizes = [5, 32], strides = [1, 1]} : vector<16x32xf32> to vector<5x32xf32>
    %cst_11 = arith.constant dense<0xFF800000> : vector<32xf32>
    %24 = vector.multi_reduction <maximumf>, %23, %cst_11 [0] : vector<5x32xf32> to vector<32xf32>
    %25 = vector.shape_cast %24 : vector<32xf32> to vector<1x32xf32>
    %26 = vector.extract_strided_slice %22 {offsets = [5, 0], sizes = [5, 32], strides = [1, 1]} : vector<16x32xf32> to vector<5x32xf32>
    %cst_12 = arith.constant dense<0xFF800000> : vector<32xf32>
    %27 = vector.multi_reduction <maximumf>, %26, %cst_12 [0] : vector<5x32xf32> to vector<32xf32>
    %28 = vector.shape_cast %27 : vector<32xf32> to vector<1x32xf32>
    %29 = vector.extract_strided_slice %22 {offsets = [10, 0], sizes = [5, 32], strides = [1, 1]} : vector<16x32xf32> to vector<5x32xf32>
    %cst_13 = arith.constant dense<0xFF800000> : vector<32xf32>
    %30 = vector.multi_reduction <maximumf>, %29, %cst_13 [0] : vector<5x32xf32> to vector<32xf32>
    %31 = vector.shape_cast %30 : vector<32xf32> to vector<1x32xf32>
    %32 = vector.extract_strided_slice %22 {offsets = [15, 0], sizes = [1, 32], strides = [1, 1]} : vector<16x32xf32> to vector<1x32xf32>
    %cst_14 = arith.constant dense<0xFF800000> : vector<32xf32>
    %33 = vector.multi_reduction <maximumf>, %32, %cst_14 [0] : vector<1x32xf32> to vector<32xf32>
    %34 = vector.shape_cast %33 : vector<32xf32> to vector<1x32xf32>
    %35 = tpu.concatenate %25, %28, %31, %34 in 0 : vector<1x32xf32>, vector<1x32xf32>, vector<1x32xf32>, vector<1x32xf32> -> vector<4x32xf32>
    %c0_15 = arith.constant 0 : index
    %c0_16 = arith.constant 0 : index
    %c0_17 = arith.constant 0 : index
    %36 = vector.load %arg4[%c0_15, %c0_16, %c0_17] : memref<2x32x64xf32, #tpu.memory_space<vmem>>, vector<1x32x64xf32>
    %37 = vector.shape_cast %36 : vector<1x32x64xf32> to vector<32x64xf32>
    %cst_18 = arith.constant dense<0.000000e+00> : vector<4x64xf32>
    %38 = tpu.matmul %35, %37, %cst_18 {dimension_numbers = #tpu.dot_dimension_numbers<[1], [0], [0], [1], [0, 0, 1, 1], [], []>} : vector<4x32xf32>, vector<32x64xf32>, vector<4x64xf32> -> vector<4x64xf32>
    %c0_19 = arith.constant 0 : index
    %c0_20 = arith.constant 0 : index
    %39 = vector.load %arg8[%c0_19, %c0_20] : memref<4x64xf32, #tpu.memory_space<vmem>>, vector<1x64xf32>
    %40 = vector.broadcast %39 : vector<1x64xf32> to vector<4x64xf32>
    %41 = arith.addf %38, %40 : vector<4x64xf32>
    %42 = vector.extract_strided_slice %41 {offsets = [0, 0], sizes = [4, 32], strides = [1, 1]} : vector<4x64xf32> to vector<4x32xf32>
    %cst_21 = arith.constant 0.000000e+00 : f32
    %43 = vector.broadcast %cst_21 : f32 to vector<4x32xf32>
    %44 = arith.maximumf %42, %43 : vector<4x32xf32>
    %45 = vector.extract_strided_slice %41 {offsets = [0, 32], sizes = [4, 32], strides = [1, 1]} : vector<4x64xf32> to vector<4x32xf32>
    %46 = arith.negf %45 : vector<4x32xf32>
    %47 = math.exp %46 : vector<4x32xf32>
    %cst_22 = arith.constant 1.000000e+00 : f32
    %48 = vector.broadcast %cst_22 : f32 to vector<4x32xf32>
    %49 = arith.addf %48, %47 : vector<4x32xf32>
    %50 = arith.divf %48, %49 : vector<4x32xf32>
    %51 = arith.mulf %50, %44 : vector<4x32xf32>
    %cst_23 = arith.constant 1.000000e+00 : f32
    %52 = vector.broadcast %cst_23 : f32 to vector<4x32xf32>
    %53 = arith.subf %52, %50 : vector<4x32xf32>
    %54 = arith.mulf %53, %35 : vector<4x32xf32>
    %55 = arith.addf %51, %54 : vector<4x32xf32>
    %c1 = arith.constant 1 : index
    %c0_24 = arith.constant 0 : index
    %c0_25 = arith.constant 0 : index
    %56 = vector.load %arg4[%c1, %c0_24, %c0_25] : memref<2x32x64xf32, #tpu.memory_space<vmem>>, vector<1x32x64xf32>
    %57 = vector.shape_cast %56 : vector<1x32x64xf32> to vector<32x64xf32>
    %cst_26 = arith.constant dense<0.000000e+00> : vector<4x64xf32>
    %58 = tpu.matmul %55, %57, %cst_26 {dimension_numbers = #tpu.dot_dimension_numbers<[1], [0], [0], [1], [0, 0, 1, 1], [], []>} : vector<4x32xf32>, vector<32x64xf32>, vector<4x64xf32> -> vector<4x64xf32>
    %c1_27 = arith.constant 1 : index
    %c0_28 = arith.constant 0 : index
    %59 = vector.load %arg8[%c1_27, %c0_28] : memref<4x64xf32, #tpu.memory_space<vmem>>, vector<1x64xf32>
    %60 = vector.broadcast %59 : vector<1x64xf32> to vector<4x64xf32>
    %61 = arith.addf %58, %60 : vector<4x64xf32>
    %62 = vector.extract_strided_slice %61 {offsets = [0, 0], sizes = [4, 32], strides = [1, 1]} : vector<4x64xf32> to vector<4x32xf32>
    %cst_29 = arith.constant 0.000000e+00 : f32
    %63 = vector.broadcast %cst_29 : f32 to vector<4x32xf32>
    %64 = arith.maximumf %62, %63 : vector<4x32xf32>
    %65 = vector.extract_strided_slice %61 {offsets = [0, 32], sizes = [4, 32], strides = [1, 1]} : vector<4x64xf32> to vector<4x32xf32>
    %66 = arith.negf %65 : vector<4x32xf32>
    %67 = math.exp %66 : vector<4x32xf32>
    %cst_30 = arith.constant 1.000000e+00 : f32
    %68 = vector.broadcast %cst_30 : f32 to vector<4x32xf32>
    %69 = arith.addf %68, %67 : vector<4x32xf32>
    %70 = arith.divf %68, %69 : vector<4x32xf32>
    %71 = arith.mulf %70, %64 : vector<4x32xf32>
    %cst_31 = arith.constant 1.000000e+00 : f32
    %72 = vector.broadcast %cst_31 : f32 to vector<4x32xf32>
    %73 = arith.subf %72, %70 : vector<4x32xf32>
    %74 = arith.mulf %73, %55 : vector<4x32xf32>
    %75 = arith.addf %71, %74 : vector<4x32xf32>
    %cst_32 = arith.constant 0.000000e+00 : f32
    %76 = vector.broadcast %cst_32 : f32 to vector<4x32xf32>
    %77 = arith.maximumf %75, %76 : vector<4x32xf32>
    %c1_33 = arith.constant 1 : index
    %c0_34 = arith.constant 0 : index
    %78 = vector.load %arg7[%c1_33, %c0_34] : memref<9x32xf32, #tpu.memory_space<vmem>>, vector<1x32xf32>
    %c2 = arith.constant 2 : index
    %c0_35 = arith.constant 0 : index
    %79 = vector.load %arg7[%c2, %c0_35] : memref<9x32xf32, #tpu.memory_space<vmem>>, vector<1x32xf32>
    %cst_36 = arith.constant dense<0.000000e+00> : vector<4xf32>
    %80 = vector.multi_reduction <add>, %77, %cst_36 [1] : vector<4x32xf32> to vector<4xf32>
    %81 = vector.shape_cast %80 : vector<4xf32> to vector<4x1xf32>
    %cst_37 = arith.constant 3.200000e+01 : f32
    %82 = vector.broadcast %cst_37 : f32 to vector<4x1xf32>
    %83 = arith.divf %81, %82 : vector<4x1xf32>
    %84 = vector.broadcast %83 : vector<4x1xf32> to vector<4x32xf32>
    %85 = arith.subf %77, %84 : vector<4x32xf32>
    %86 = arith.mulf %85, %85 : vector<4x32xf32>
    %cst_38 = arith.constant dense<0.000000e+00> : vector<4xf32>
    %87 = vector.multi_reduction <add>, %86, %cst_38 [1] : vector<4x32xf32> to vector<4xf32>
    %88 = vector.shape_cast %87 : vector<4xf32> to vector<4x1xf32>
    %cst_39 = arith.constant 3.200000e+01 : f32
    %89 = vector.broadcast %cst_39 : f32 to vector<4x1xf32>
    %90 = arith.divf %88, %89 : vector<4x1xf32>
    %cst_40 = arith.constant 9.99999974E-6 : f32
    %91 = vector.broadcast %cst_40 : f32 to vector<4x1xf32>
    %92 = arith.addf %90, %91 : vector<4x1xf32>
    %93 = math.rsqrt %92 : vector<4x1xf32>
    %94 = vector.broadcast %93 : vector<4x1xf32> to vector<4x32xf32>
    %95 = arith.mulf %85, %94 : vector<4x32xf32>
    %96 = vector.broadcast %78 : vector<1x32xf32> to vector<4x32xf32>
    %97 = arith.mulf %95, %96 : vector<4x32xf32>
    %98 = vector.broadcast %79 : vector<1x32xf32> to vector<4x32xf32>
    %99 = arith.addf %97, %98 : vector<4x32xf32>
    %c0_41 = arith.constant 0 : index
    %c0_42 = arith.constant 0 : index
    %c0_43 = arith.constant 0 : index
    %100 = vector.load %arg5[%c0_41, %c0_42, %c0_43] : memref<2x32x64xf32, #tpu.memory_space<vmem>>, vector<1x32x64xf32>
    %101 = vector.shape_cast %100 : vector<1x32x64xf32> to vector<32x64xf32>
    %cst_44 = arith.constant dense<0.000000e+00> : vector<4x64xf32>
    %102 = tpu.matmul %99, %101, %cst_44 {dimension_numbers = #tpu.dot_dimension_numbers<[1], [0], [0], [1], [0, 0, 1, 1], [], []>} : vector<4x32xf32>, vector<32x64xf32>, vector<4x64xf32> -> vector<4x64xf32>
    %c2_45 = arith.constant 2 : index
    %c0_46 = arith.constant 0 : index
    %103 = vector.load %arg8[%c2_45, %c0_46] : memref<4x64xf32, #tpu.memory_space<vmem>>, vector<1x64xf32>
    %104 = vector.broadcast %103 : vector<1x64xf32> to vector<4x64xf32>
    %105 = arith.addf %102, %104 : vector<4x64xf32>
    %cst_47 = arith.constant 0.000000e+00 : f32
    %106 = vector.broadcast %cst_47 : f32 to vector<4x64xf32>
    %107 = arith.maximumf %105, %106 : vector<4x64xf32>
    %c0_48 = arith.constant 0 : index
    %c0_49 = arith.constant 0 : index
    %c0_50 = arith.constant 0 : index
    %108 = vector.load %arg6[%c0_48, %c0_49, %c0_50] : memref<2x64x32xf32, #tpu.memory_space<vmem>>, vector<1x64x32xf32>
    %109 = vector.shape_cast %108 : vector<1x64x32xf32> to vector<64x32xf32>
    %cst_51 = arith.constant dense<0.000000e+00> : vector<4x32xf32>
    %110 = tpu.matmul %107, %109, %cst_51 {dimension_numbers = #tpu.dot_dimension_numbers<[1], [0], [0], [1], [0, 0, 1, 1], [], []>} : vector<4x64xf32>, vector<64x32xf32>, vector<4x32xf32> -> vector<4x32xf32>
    %c3 = arith.constant 3 : index
    %c0_52 = arith.constant 0 : index
    %111 = vector.load %arg7[%c3, %c0_52] : memref<9x32xf32, #tpu.memory_space<vmem>>, vector<1x32xf32>
    %112 = vector.broadcast %111 : vector<1x32xf32> to vector<4x32xf32>
    %113 = arith.addf %110, %112 : vector<4x32xf32>
    %114 = arith.addf %113, %99 : vector<4x32xf32>
    %c4 = arith.constant 4 : index
    %c0_53 = arith.constant 0 : index
    %115 = vector.load %arg7[%c4, %c0_53] : memref<9x32xf32, #tpu.memory_space<vmem>>, vector<1x32xf32>
    %c5 = arith.constant 5 : index
    %c0_54 = arith.constant 0 : index
    %116 = vector.load %arg7[%c5, %c0_54] : memref<9x32xf32, #tpu.memory_space<vmem>>, vector<1x32xf32>
    %cst_55 = arith.constant dense<0.000000e+00> : vector<4xf32>
    %117 = vector.multi_reduction <add>, %114, %cst_55 [1] : vector<4x32xf32> to vector<4xf32>
    %118 = vector.shape_cast %117 : vector<4xf32> to vector<4x1xf32>
    %cst_56 = arith.constant 3.200000e+01 : f32
    %119 = vector.broadcast %cst_56 : f32 to vector<4x1xf32>
    %120 = arith.divf %118, %119 : vector<4x1xf32>
    %121 = vector.broadcast %120 : vector<4x1xf32> to vector<4x32xf32>
    %122 = arith.subf %114, %121 : vector<4x32xf32>
    %123 = arith.mulf %122, %122 : vector<4x32xf32>
    %cst_57 = arith.constant dense<0.000000e+00> : vector<4xf32>
    %124 = vector.multi_reduction <add>, %123, %cst_57 [1] : vector<4x32xf32> to vector<4xf32>
    %125 = vector.shape_cast %124 : vector<4xf32> to vector<4x1xf32>
    %cst_58 = arith.constant 3.200000e+01 : f32
    %126 = vector.broadcast %cst_58 : f32 to vector<4x1xf32>
    %127 = arith.divf %125, %126 : vector<4x1xf32>
    %cst_59 = arith.constant 9.99999974E-6 : f32
    %128 = vector.broadcast %cst_59 : f32 to vector<4x1xf32>
    %129 = arith.addf %127, %128 : vector<4x1xf32>
    %130 = math.rsqrt %129 : vector<4x1xf32>
    %131 = vector.broadcast %130 : vector<4x1xf32> to vector<4x32xf32>
    %132 = arith.mulf %122, %131 : vector<4x32xf32>
    %133 = vector.broadcast %115 : vector<1x32xf32> to vector<4x32xf32>
    %134 = arith.mulf %132, %133 : vector<4x32xf32>
    %135 = vector.broadcast %116 : vector<1x32xf32> to vector<4x32xf32>
    %136 = arith.addf %134, %135 : vector<4x32xf32>
    %c1_60 = arith.constant 1 : index
    %c0_61 = arith.constant 0 : index
    %c0_62 = arith.constant 0 : index
    %137 = vector.load %arg5[%c1_60, %c0_61, %c0_62] : memref<2x32x64xf32, #tpu.memory_space<vmem>>, vector<1x32x64xf32>
    %138 = vector.shape_cast %137 : vector<1x32x64xf32> to vector<32x64xf32>
    %cst_63 = arith.constant dense<0.000000e+00> : vector<4x64xf32>
    %139 = tpu.matmul %136, %138, %cst_63 {dimension_numbers = #tpu.dot_dimension_numbers<[1], [0], [0], [1], [0, 0, 1, 1], [], []>} : vector<4x32xf32>, vector<32x64xf32>, vector<4x64xf32> -> vector<4x64xf32>
    %c3_64 = arith.constant 3 : index
    %c0_65 = arith.constant 0 : index
    %140 = vector.load %arg8[%c3_64, %c0_65] : memref<4x64xf32, #tpu.memory_space<vmem>>, vector<1x64xf32>
    %141 = vector.broadcast %140 : vector<1x64xf32> to vector<4x64xf32>
    %142 = arith.addf %139, %141 : vector<4x64xf32>
    %cst_66 = arith.constant 0.000000e+00 : f32
    %143 = vector.broadcast %cst_66 : f32 to vector<4x64xf32>
    %144 = arith.maximumf %142, %143 : vector<4x64xf32>
    %c1_67 = arith.constant 1 : index
    %c0_68 = arith.constant 0 : index
    %c0_69 = arith.constant 0 : index
    %145 = vector.load %arg6[%c1_67, %c0_68, %c0_69] : memref<2x64x32xf32, #tpu.memory_space<vmem>>, vector<1x64x32xf32>
    %146 = vector.shape_cast %145 : vector<1x64x32xf32> to vector<64x32xf32>
    %cst_70 = arith.constant dense<0.000000e+00> : vector<4x32xf32>
    %147 = tpu.matmul %144, %146, %cst_70 {dimension_numbers = #tpu.dot_dimension_numbers<[1], [0], [0], [1], [0, 0, 1, 1], [], []>} : vector<4x64xf32>, vector<64x32xf32>, vector<4x32xf32> -> vector<4x32xf32>
    %c6 = arith.constant 6 : index
    %c0_71 = arith.constant 0 : index
    %148 = vector.load %arg7[%c6, %c0_71] : memref<9x32xf32, #tpu.memory_space<vmem>>, vector<1x32xf32>
    %149 = vector.broadcast %148 : vector<1x32xf32> to vector<4x32xf32>
    %150 = arith.addf %147, %149 : vector<4x32xf32>
    %151 = arith.addf %150, %136 : vector<4x32xf32>
    %c7 = arith.constant 7 : index
    %c0_72 = arith.constant 0 : index
    %152 = vector.load %arg7[%c7, %c0_72] : memref<9x32xf32, #tpu.memory_space<vmem>>, vector<1x32xf32>
    %c8 = arith.constant 8 : index
    %c0_73 = arith.constant 0 : index
    %153 = vector.load %arg7[%c8, %c0_73] : memref<9x32xf32, #tpu.memory_space<vmem>>, vector<1x32xf32>
    %cst_74 = arith.constant dense<0.000000e+00> : vector<4xf32>
    %154 = vector.multi_reduction <add>, %151, %cst_74 [1] : vector<4x32xf32> to vector<4xf32>
    %155 = vector.shape_cast %154 : vector<4xf32> to vector<4x1xf32>
    %cst_75 = arith.constant 3.200000e+01 : f32
    %156 = vector.broadcast %cst_75 : f32 to vector<4x1xf32>
    %157 = arith.divf %155, %156 : vector<4x1xf32>
    %158 = vector.broadcast %157 : vector<4x1xf32> to vector<4x32xf32>
    %159 = arith.subf %151, %158 : vector<4x32xf32>
    %160 = arith.mulf %159, %159 : vector<4x32xf32>
    %cst_76 = arith.constant dense<0.000000e+00> : vector<4xf32>
    %161 = vector.multi_reduction <add>, %160, %cst_76 [1] : vector<4x32xf32> to vector<4xf32>
    %162 = vector.shape_cast %161 : vector<4xf32> to vector<4x1xf32>
    %cst_77 = arith.constant 3.200000e+01 : f32
    %163 = vector.broadcast %cst_77 : f32 to vector<4x1xf32>
    %164 = arith.divf %162, %163 : vector<4x1xf32>
    %cst_78 = arith.constant 9.99999974E-6 : f32
    %165 = vector.broadcast %cst_78 : f32 to vector<4x1xf32>
    %166 = arith.addf %164, %165 : vector<4x1xf32>
    %167 = math.rsqrt %166 : vector<4x1xf32>
    %168 = vector.broadcast %167 : vector<4x1xf32> to vector<4x32xf32>
    %169 = arith.mulf %159, %168 : vector<4x32xf32>
    %170 = vector.broadcast %152 : vector<1x32xf32> to vector<4x32xf32>
    %171 = arith.mulf %169, %170 : vector<4x32xf32>
    %172 = vector.broadcast %153 : vector<1x32xf32> to vector<4x32xf32>
    %173 = arith.addf %171, %172 : vector<4x32xf32>
    %c0_79 = arith.constant 0 : index
    %c0_80 = arith.constant 0 : index
    %c0_81 = arith.constant 0 : index
    %174 = vector.load %arg9[%c0_79, %c0_80, %c0_81] : memref<1x4x32xf32, #tpu.memory_space<vmem>>, vector<1x4x32xf32>
    %175 = vector.shape_cast %174 : vector<1x4x32xf32> to vector<4x32xf32>
    %176 = vector.shape_cast %173 : vector<4x32xf32> to vector<1x4x32xf32>
    tpu.vector_store %arg9[%c0_79, %c0_80, %c0_81], %176 {strides = array<i32>} : memref<1x4x32xf32, #tpu.memory_space<vmem>>, vector<1x4x32xf32>,
    return
  }
  func.func @transform_0(%arg0: i32) -> (i32, i32, i32) {
    %c0_i32 = arith.constant 0 : i32
    %c0_i32_0 = arith.constant 0 : i32
    %c0_i32_1 = arith.constant 0 : i32
    return %arg0, %c0_i32, %c0_i32_0 : i32, i32, i32
  }
  func.func @transform_1(%arg0: i32) -> (i32, i32, i32) {
    %c0_i32 = arith.constant 0 : i32
    %c0_i32_0 = arith.constant 0 : i32
    %c0_i32_1 = arith.constant 0 : i32
    return %arg0, %c0_i32, %c0_i32_0 : i32, i32, i32
  }
  func.func @transform_2(%arg0: i32) -> (i32, i32) {
    %c0_i32 = arith.constant 0 : i32
    %c0_i32_0 = arith.constant 0 : i32
    %c0_i32_1 = arith.constant 0 : i32
    return %c0_i32, %c0_i32_0 : i32, i32
  }
  func.func @transform_3(%arg0: i32) -> (i32, i32, i32) {
    %c0_i32 = arith.constant 0 : i32
    %c0_i32_0 = arith.constant 0 : i32
    %c0_i32_1 = arith.constant 0 : i32
    %c0_i32_2 = arith.constant 0 : i32
    return %c0_i32, %c0_i32_0, %c0_i32_1 : i32, i32, i32
  }
  func.func @transform_4(%arg0: i32) -> (i32, i32, i32) {
    %c0_i32 = arith.constant 0 : i32
    %c0_i32_0 = arith.constant 0 : i32
    %c0_i32_1 = arith.constant 0 : i32
    %c0_i32_2 = arith.constant 0 : i32
    return %c0_i32, %c0_i32_0, %c0_i32_1 : i32, i32, i32
  }
  func.func @transform_5(%arg0: i32) -> (i32, i32, i32) {
    %c0_i32 = arith.constant 0 : i32
    %c0_i32_0 = arith.constant 0 : i32
    %c0_i32_1 = arith.constant 0 : i32
    %c0_i32_2 = arith.constant 0 : i32
    return %c0_i32, %c0_i32_0, %c0_i32_1 : i32, i32, i32
  }
  func.func @transform_6(%arg0: i32) -> (i32, i32) {
    %c0_i32 = arith.constant 0 : i32
    %c0_i32_0 = arith.constant 0 : i32
    %c0_i32_1 = arith.constant 0 : i32
    return %c0_i32, %c0_i32_0 : i32, i32
  }
  func.func @transform_7(%arg0: i32) -> (i32, i32) {
    %c0_i32 = arith.constant 0 : i32
    %c0_i32_0 = arith.constant 0 : i32
    %c0_i32_1 = arith.constant 0 : i32
    return %c0_i32, %c0_i32_0 : i32, i32
  }
  func.func @transform_8(%arg0: i32) -> (i32, i32, i32) {
    %c0_i32 = arith.constant 0 : i32
    %c0_i32_0 = arith.constant 0 : i32
    %c0_i32_1 = arith.constant 0 : i32
    return %arg0, %c0_i32, %c0_i32_0 : i32, i32, i32
  }
}

</mosaic_0001>

<llo_original>
// kernel: lee_style_char_proc.1
$region0: #{lee_style_char_proc.1}
  #allocation0 [shape = 'u32[]', space=smem, size = 0x4, offset = 0x4, fixed_abs, tag = 'smem constant byte address 0x4 - core index']
  #allocation1 [shape = 'u32[72,128]{1,0:T(1,128)}', space=vmem, size = 0x9000, scoped, tag = 'internal scratch']
  %s0 = inlined_call_operand.vmem [shape: f32[2,16,16], index: 0, kind: input, shape index: {}]
  %s1 = inlined_call_operand.vmem [shape: f32[2,16,1], index: 1, kind: input, shape index: {}]
  %s2 = inlined_call_operand.vmem [shape: f32[112,32], index: 2, kind: input, shape index: {}]
  %s3 = inlined_call_operand.vmem [shape: f32[2,32,64], index: 3, kind: input, shape index: {}]
  %s4 = inlined_call_operand.vmem [shape: f32[2,32,64], index: 4, kind: input, shape index: {}]
  %s5 = inlined_call_operand.vmem [shape: f32[2,64,32], index: 5, kind: input, shape index: {}]
  %s6 = inlined_call_operand.vmem [shape: f32[9,32], index: 6, kind: input, shape index: {}]
  %s7 = inlined_call_operand.vmem [shape: f32[4,64], index: 7, kind: input, shape index: {}]
  %s8 = inlined_call_operand.hbm [shape: f32[2,4,32], index: 8, kind: output, shape index: {}]
  %s9 = sld [smem:[#allocation0]]
  $region65: #{lee_style_char_proc.1} parent=0
    _
  %s11 = ssub.s32 1, %s9
  %s12 = scalar_select 0, %s11, %s9
  $region1: #{lee_style_char_proc.1} parent=0
    #allocation2 [shape = 'u8[4096]{0}', space=vmem, size = 0x1000, scoped, tag = 'output window, operand 0']
    #allocation3 [shape = 's32[2]{0}', space=sflag, size = 0x8, scoped, tag = 'scoped memory for lee_style_char_proc.1']
    %13 = vsyncpa [#allocation3], 0
    %s14 = scalar_lea.sflag [#allocation3], 1
    %15 = vsyncpa %s14, 0
    loop: start=0, step=1, limit=4
    $region2: #{lee_style_char_proc.1} parent=1 // loop_pre_header
      _
    $region3: #{lee_style_char_proc.1} parent=1 // loop_header
      %s17 = sphi 0, %s21
      %p18 = scmp.ge.s32.totalorder %s17, 4
      %s27 = sphi 0, %s29
      %s30 = sphi 0, %s27
      %s31 = sphi 0, %s30
      %s47 = sphi 0, %s31
      %s53 = sphi 0, %s55
      %s56 = sphi 0, %s53
      %s57 = sphi 0, %s56
      %s73 = sphi 0, %s57
      %s77 = sphi 0, %s77
      %s79 = sphi 0, %s77
      %s80 = sphi 0, %s79
      %s94 = sphi 0, %s80
      %s98 = sphi 0, %s98
      %s100 = sphi 0, %s98
      %s101 = sphi 0, %s100
      %s115 = sphi 0, %s101
      %s119 = sphi 0, %s119
      %s121 = sphi 0, %s119
      %s122 = sphi 0, %s121
      %s136 = sphi 0, %s122
      %s140 = sphi 0, %s140
      %s142 = sphi 0, %s140
      %s143 = sphi 0, %s142
      %s157 = sphi 0, %s143
      %s161 = sphi 0, %s161
      %s163 = sphi 0, %s161
      %s164 = sphi 0, %s163
      %s178 = sphi 0, %s164
      %s182 = sphi 0, %s182
      %s184 = sphi 0, %s182
      %s185 = sphi 0, %s184
      %s199 = sphi 0, %s185
      %s205 = sphi 0, %s207
      %s208 = sphi 0, %s205
      %s209 = sphi 0, %s208
      %s225 = sphi 0, %s209
    $region4: #{lee_style_char_proc.1} parent=1 // loop_header_branch
      %20 = sbr.rel (%p18) target = $region8
    $region5: #{lee_style_char_proc.1} parent=1 // loop_body
      %s22 = ssub.s32 %s17, 1
      %s23 = ssub.s32 %s17, 2
      %s24 = sadd.s32 %s17, 1
      %s25 = ssub.s32 %s17, %s24
      %p26 = scmp.eq.s32.totalorder %s25, 0
      %s28 = sadd.s32 %s27, 1
      %s29 = scalar_select %p26, %s27, %s28
      %p32 = pneg %p26
      %p33 = scmp.eq.s32.totalorder %s17, 1
      %p34 = por %p32, %p33
      %p35 = scmp.ne.s32.totalorder %s27, %s30
      %p36 = scmp.eq.s32.totalorder %s17, 0
      %p37 = por %p35, %p36
      %p38 = scmp.ne.s32.totalorder %s27, %s30
      %p39 = scmp.eq.s32.totalorder %s22, 1
      %p40 = por %p38, %p39
      %p41 = scmp.ne.s32.totalorder %s30, %s31
      %p42 = scmp.eq.s32.totalorder %s22, 0
      %p43 = por %p41, %p42
      %p44 = scmp.ne.s32.totalorder %s30, %s31
      %p45 = scmp.eq.s32.totalorder %s23, 1
      %p46 = por %p44, %p45
      %p48 = scmp.ne.s32.totalorder %s31, %s47
      %p49 = scmp.eq.s32.totalorder %s23, 0
      %p50 = por %p48, %p49
      %s51 = ssub.s32 %s17, %s24
      %p52 = scmp.eq.s32.totalorder %s51, 0
      %s54 = sadd.s32 %s53, 1
      %s55 = scalar_select %p52, %s53, %s54
      %p58 = pneg %p52
      %p59 = scmp.eq.s32.totalorder %s17, 1
      %p60 = por %p58, %p59
      %p61 = scmp.ne.s32.totalorder %s53, %s56
      %p62 = scmp.eq.s32.totalorder %s17, 0
      %p63 = por %p61, %p62
      %p64 = scmp.ne.s32.totalorder %s53, %s56
      %p65 = scmp.eq.s32.totalorder %s22, 1
      %p66 = por %p64, %p65
      %p67 = scmp.ne.s32.totalorder %s56, %s57
      %p68 = scmp.eq.s32.totalorder %s22, 0
      %p69 = por %p67, %p68
      %p70 = scmp.ne.s32.totalorder %s56, %s57
      %p71 = scmp.eq.s32.totalorder %s23, 1
      %p72 = por %p70, %p71
      %p74 = scmp.ne.s32.totalorder %s57, %s73
      %p75 = scmp.eq.s32.totalorder %s23, 0
      %p76 = por %p74, %p75
      %s78 = sadd.s32 %s77, 1
      %p81 = scmp.eq.s32.totalorder %s17, 1
      %p82 = scmp.ne.s32.totalorder %s77, %s79
      %p83 = scmp.eq.s32.totalorder %s17, 0
      %p84 = por %p82, %p83
      %p85 = scmp.ne.s32.totalorder %s77, %s79
      %p86 = scmp.eq.s32.totalorder %s22, 1
      %p87 = por %p85, %p86
      %p88 = scmp.ne.s32.totalorder %s79, %s80
      %p89 = scmp.eq.s32.totalorder %s22, 0
      %p90 = por %p88, %p89
      %p91 = scmp.ne.s32.totalorder %s79, %s80
      %p92 = scmp.eq.s32.totalorder %s23, 1
      %p93 = por %p91, %p92
      %p95 = scmp.ne.s32.totalorder %s80, %s94
      %p96 = scmp.eq.s32.totalorder %s23, 0
      %p97 = por %p95, %p96
      %s99 = sadd.s32 %s98, 1
      %p102 = scmp.eq.s32.totalorder %s17, 1
      %p103 = scmp.ne.s32.totalorder %s98, %s100
      %p104 = scmp.eq.s32.totalorder %s17, 0
      %p105 = por %p103, %p104
      %p106 = scmp.ne.s32.totalorder %s98, %s100
      %p107 = scmp.eq.s32.totalorder %s22, 1
      %p108 = por %p106, %p107
      %p109 = scmp.ne.s32.totalorder %s100, %s101
      %p110 = scmp.eq.s32.totalorder %s22, 0
      %p111 = por %p109, %p110
      %p112 = scmp.ne.s32.totalorder %s100, %s101
      %p113 = scmp.eq.s32.totalorder %s23, 1
      %p114 = por %p112, %p113
      %p116 = scmp.ne.s32.totalorder %s101, %s115
      %p117 = scmp.eq.s32.totalorder %s23, 0
      %p118 = por %p116, %p117
      %s120 = sadd.s32 %s119, 1
      %p123 = scmp.eq.s32.totalorder %s17, 1
      %p124 = scmp.ne.s32.totalorder %s119, %s121
      %p125 = scmp.eq.s32.totalorder %s17, 0
      %p126 = por %p124, %p125
      %p127 = scmp.ne.s32.totalorder %s119, %s121
      %p128 = scmp.eq.s32.totalorder %s22, 1
      %p129 = por %p127, %p128
      %p130 = scmp.ne.s32.totalorder %s121, %s122
      %p131 = scmp.eq.s32.totalorder %s22, 0
      %p132 = por %p130, %p131
      %p133 = scmp.ne.s32.totalorder %s121, %s122
      %p134 = scmp.eq.s32.totalorder %s23, 1
      %p135 = por %p133, %p134
      %p137 = scmp.ne.s32.totalorder %s122, %s136
      %p138 = scmp.eq.s32.totalorder %s23, 0
      %p139 = por %p137, %p138
      %s141 = sadd.s32 %s140, 1
      %p144 = scmp.eq.s32.totalorder %s17, 1
      %p145 = scmp.ne.s32.totalorder %s140, %s142
      %p146 = scmp.eq.s32.totalorder %s17, 0
      %p147 = por %p145, %p146
      %p148 = scmp.ne.s32.totalorder %s140, %s142
      %p149 = scmp.eq.s32.totalorder %s22, 1
      %p150 = por %p148, %p149
      %p151 = scmp.ne.s32.totalorder %s142, %s143
      %p152 = scmp.eq.s32.totalorder %s22, 0
      %p153 = por %p151, %p152
      %p154 = scmp.ne.s32.totalorder %s142, %s143
      %p155 = scmp.eq.s32.totalorder %s23, 1
      %p156 = por %p154, %p155
      %p158 = scmp.ne.s32.totalorder %s143, %s157
      %p159 = scmp.eq.s32.totalorder %s23, 0
      %p160 = por %p158, %p159
      %s162 = sadd.s32 %s161, 1
      %p165 = scmp.eq.s32.totalorder %s17, 1
      %p166 = scmp.ne.s32.totalorder %s161, %s163
      %p167 = scmp.eq.s32.totalorder %s17, 0
      %p168 = por %p166, %p167
      %p169 = scmp.ne.s32.totalorder %s161, %s163
      %p170 = scmp.eq.s32.totalorder %s22, 1
      %p171 = por %p169, %p170
      %p172 = scmp.ne.s32.totalorder %s163, %s164
      %p173 = scmp.eq.s32.totalorder %s22, 0
      %p174 = por %p172, %p173
      %p175 = scmp.ne.s32.totalorder %s163, %s164
      %p176 = scmp.eq.s32.totalorder %s23, 1
      %p177 = por %p175, %p176
      %p179 = scmp.ne.s32.totalorder %s164, %s178
      %p180 = scmp.eq.s32.totalorder %s23, 0
      %p181 = por %p179, %p180
      %s183 = sadd.s32 %s182, 1
      %p186 = scmp.eq.s32.totalorder %s17, 1
      %p187 = scmp.ne.s32.totalorder %s182, %s184
      %p188 = scmp.eq.s32.totalorder %s17, 0
      %p189 = por %p187, %p188
      %p190 = scmp.ne.s32.totalorder %s182, %s184
      %p191 = scmp.eq.s32.totalorder %s22, 1
      %p192 = por %p190, %p191
      %p193 = scmp.ne.s32.totalorder %s184, %s185
      %p194 = scmp.eq.s32.totalorder %s22, 0
      %p195 = por %p193, %p194
      %p196 = scmp.ne.s32.totalorder %s184, %s185
      %p197 = scmp.eq.s32.totalorder %s23, 1
      %p198 = por %p196, %p197
      %p200 = scmp.ne.s32.totalorder %s185, %s199
      %p201 = scmp.eq.s32.totalorder %s23, 0
      %p202 = por %p200, %p201
      %s203 = ssub.s32 %s17, %s24
      %p204 = scmp.eq.s32.totalorder %s203, 0
      %s206 = sadd.s32 %s205, 1
      %s207 = scalar_select %p204, %s205, %s206
      %p210 = pneg %p204
      %p211 = scmp.eq.s32.totalorder %s17, 1
      %p212 = por %p210, %p211
      %p213 = scmp.ne.s32.totalorder %s205, %s208
      %p214 = scmp.eq.s32.totalorder %s17, 0
      %p215 = por %p213, %p214
      %p216 = scmp.ne.s32.totalorder %s205, %s208
      %p217 = scmp.eq.s32.totalorder %s22, 1
      %p218 = por %p216, %p217
      %p219 = scmp.ne.s32.totalorder %s208, %s209
      %p220 = scmp.eq.s32.totalorder %s22, 0
      %p221 = por %p219, %p220
      %p222 = scmp.ne.s32.totalorder %s208, %s209
      %p223 = scmp.eq.s32.totalorder %s23, 1
      %p224 = por %p222, %p223
      %p226 = scmp.ne.s32.totalorder %s209, %s225
      %p227 = scmp.eq.s32.totalorder %s23, 0
      %p228 = por %p226, %p227
      %p229 = scmp.le.s32.totalorder 1, %s17
      %p230 = scmp.lt.s32.totalorder %s17, 3
      %p231 = pnand %p229, %p230
      %p232 = pneg %p231
      // Predicated region
      $region9: #{lee_style_char_proc.1} parent=5 // pred_check
        _
      $region10: #{lee_style_char_proc.1} parent=5 // pred_check_branch
        %234 = sbr.rel (%p231) target = $region12
      $region11: #{lee_style_char_proc.1} parent=5 // pred_region
        %s235 = ssub.s32 %s17, 1
        // Predicated region
        $region13: #{lee_style_char_proc.1} parent=11 // pred_check
          %p236 = pneg %p90
        $region14: #{lee_style_char_proc.1} parent=11 // pred_check_branch
          %238 = sbr.rel (%p236) target = $region16
        $region15: #{lee_style_char_proc.1} parent=11 // pred_region
          _
        $region16: #{lee_style_char_proc.1} parent=11 // pred_fallthru
          _
        // Predicated region
        $region17: #{lee_style_char_proc.1} parent=11 // pred_check
          %p239 = pneg %p111
        $region18: #{lee_style_char_proc.1} parent=11 // pred_check_branch
          %241 = sbr.rel (%p239) target = $region20
        $region19: #{lee_style_char_proc.1} parent=11 // pred_region
          _
        $region20: #{lee_style_char_proc.1} parent=11 // pred_fallthru
          _
        // Predicated region
        $region21: #{lee_style_char_proc.1} parent=11 // pred_check
          %p242 = pneg %p132
        $region22: #{lee_style_char_proc.1} parent=11 // pred_check_branch
          %244 = sbr.rel (%p242) target = $region24
        $region23: #{lee_style_char_proc.1} parent=11 // pred_region
          _
        $region24: #{lee_style_char_proc.1} parent=11 // pred_fallthru
          _
        // Predicated region
        $region25: #{lee_style_char_proc.1} parent=11 // pred_check
          %p245 = pneg %p153
        $region26: #{lee_style_char_proc.1} parent=11 // pred_check_branch
          %247 = sbr.rel (%p245) target = $region28
        $region27: #{lee_style_char_proc.1} parent=11 // pred_region
          _
        $region28: #{lee_style_char_proc.1} parent=11 // pred_fallthru
          _
        // Predicated region
        $region29: #{lee_style_char_proc.1} parent=11 // pred_check
          %p248 = pneg %p174
        $region30: #{lee_style_char_proc.1} parent=11 // pred_check_branch
          %250 = sbr.rel (%p248) target = $region32
        $region31: #{lee_style_char_proc.1} parent=11 // pred_region
          _
        $region32: #{lee_style_char_proc.1} parent=11 // pred_fallthru
          _
        // Predicated region
        $region33: #{lee_style_char_proc.1} parent=11 // pred_check
          %p251 = pneg %p195
        $region34: #{lee_style_char_proc.1} parent=11 // pred_check_branch
          %253 = sbr.rel (%p251) target = $region36
        $region35: #{lee_style_char_proc.1} parent=11 // pred_region
          _
        $region36: #{lee_style_char_proc.1} parent=11 // pred_fallthru
          _
      $region12: #{lee_style_char_proc.1} parent=5 // pred_fallthru
        _
      %p254 = scmp.lt.s32.totalorder %s17, 2
      // Predicated region
      $region37: #{lee_style_char_proc.1} parent=5 // pred_check
        %p255 = pneg %p254
      $region38: #{lee_style_char_proc.1} parent=5 // pred_check_branch
        %257 = sbr.rel (%p255) target = $region40
      $region39: #{lee_style_char_proc.1} parent=5 // pred_region
        // Predicated region
        $region41: #{lee_style_char_proc.1} parent=39 // pred_check
          %p258 = pneg %p37
        $region42: #{lee_style_char_proc.1} parent=39 // pred_check_branch
          %260 = sbr.rel (%p258) target = $region44
        $region43: #{lee_style_char_proc.1} parent=39 // pred_region
          %p261 = scmp.lt.s32.totalorder %s17, 1
          %s262 = scalar_select %p261, %s17, 1
          %s263 = smul.addr %s262, 2
          %s264 = smul.addr %s263, 8
          %s265 = scalar_lea.vmem %s0, %s264
        $region44: #{lee_style_char_proc.1} parent=39 // pred_fallthru
          _
        // Predicated region
        $region45: #{lee_style_char_proc.1} parent=39 // pred_check
          %p266 = pneg %p63
        $region46: #{lee_style_char_proc.1} parent=39 // pred_check_branch
          %268 = sbr.rel (%p266) target = $region48
        $region47: #{lee_style_char_proc.1} parent=39 // pred_region
          %p269 = scmp.lt.s32.totalorder %s17, 1
          %s270 = scalar_select %p269, %s17, 1
          %s271 = smul.addr %s270, 2
          %s272 = smul.addr %s271, 8
          %s273 = scalar_lea.vmem %s1, %s272
        $region48: #{lee_style_char_proc.1} parent=39 // pred_fallthru
          _
      $region40: #{lee_style_char_proc.1} parent=5 // pred_fallthru
        _
      %p274 = scmp.le.s32.totalorder 1, %s17
      %p275 = scmp.lt.s32.totalorder %s17, 3
      %p276 = pnand %p274, %p275
      %p277 = pneg %p276
      // Predicated region
      $region49: #{lee_style_char_proc.1} parent=5 // pred_check
        _
      $region50: #{lee_style_char_proc.1} parent=5 // pred_check_branch
        %279 = sbr.rel (%p276) target = $region52
      $region51: #{lee_style_char_proc.1} parent=5 // pred_region
        %s280 = ssub.s32 %s17, 1
        %p281 = scmp.lt.s32.totalorder %s22, 1
        %s282 = scalar_select %p281, %s22, 1
        %s283 = smul.addr %s282, 2
        %s284 = smul.addr %s283, 8
        %s285 = scalar_lea.vmem %s0, %s284
        %p286 = pneg %p43
        %p287 = pneg %p40
        %p288 = scmp.lt.s32.totalorder %s22, 1
        %s289 = scalar_select %p288, %s22, 1
        %s290 = smul.addr %s289, 2
        %s291 = smul.addr %s290, 8
        %s292 = scalar_lea.vmem %s1, %s291
        %p293 = pneg %p69
        %p294 = pneg %p66
        %p295 = pneg %p90
        %p296 = pneg %p87
        %p297 = pneg %p111
        %p298 = pneg %p108
        %p299 = pneg %p132
        %p300 = pneg %p129
        %p301 = pneg %p153
        %p302 = pneg %p150
        %p303 = pneg %p174
        %p304 = pneg %p171
        %p305 = pneg %p195
        %p306 = pneg %p192
        %p307 = pneg %p221
        %p308 = pneg %p218
        %s309 = sand.u32 %s208, 1
        %s310 = scalar_lea.sflag [#allocation3], %s309
        %s311 = sand.u32 %s208, 1
        %s312 = smul.addr %s311, 4
        %s313 = scalar_lea.vmem [#allocation2], %s312
        %p314 = scmp.lt.s32.totalorder %s22, 1
        %s315 = scalar_select %p314, %s22, 1
        %s316 = smul.addr %s315, 2
        %s317 = smul.addr %s316, 8
        %s318 = scalar_lea.vmem %s0, %s317
        %p319 = scmp.lt.s32.totalorder %s22, 1
        %s320 = scalar_select %p319, %s22, 1
        %s321 = smul.addr %s320, 2
        %s322 = smul.addr %s321, 8
        %s323 = scalar_lea.vmem %s1, %s322
        %v324 = vld [vmem:[%s318] sm:$0xff]
        %v325 = vld [vmem:[%s318 + $0x8] sm:$0xff]
        %v326 = vld [vmem:[%s323] sm:$0xff]
        %v327 = vld [vmem:[%s323 + $0x8] sm:$0xff]
        %329 = vset.pattern.permute.xlu0 0
        %330 = vperm.xlu0 %329, %v326
        %v331 = vpop.permute.xlu0 %330
        %334 = vset.pattern.permute.xlu0 0
        %335 = vperm.xlu0 %334, %v327
        %v336 = vpop.permute.xlu0 %335
        %v338 = vmul.f32 %v324, %v331
        %v339 = vmul.f32 %v325, %v336
        %vm342 = vcmask 1042432
        %v343 = vrot.slane %v338, 5
        %v344 = vrot.slane %v339, 5
        %v345 = vsel %vm342, %v343, %v344
        %v349 = vsel %vm342, 0.0, %v343
        %v350 = vsel %vm342, %v344, 0.0
        %vm353 = vcmask 1046528
        %v354 = vrot.slane %v349, 1
        %v355 = vrot.slane %v345, 1
        %v356 = vsel %vm353, %v354, %v355
        %v357 = vrot.slane %v350, 1
        %v358 = vsel %vm353, %v355, %v357
        %359 = vrot.lane.b32.xlu0 %v356, 16
        %v360 = vpop.permute.xlu0 %359
        %361 = vrot.lane.b32.xlu0 %v358, 16
        %v362 = vpop.permute.xlu0 %361
        %vm365 = vcmask 1045504
        %v366 = vrot.slane %v349, 2
        %v367 = vrot.slane %v345, 2
        %v368 = vsel %vm365, %v366, %v367
        %v369 = vrot.slane %v350, 2
        %v370 = vsel %vm365, %v367, %v369
        %371 = vrot.lane.b32.xlu0 %v368, 32
        %v372 = vpop.permute.xlu0 %371
        %373 = vrot.lane.b32.xlu0 %v370, 32
        %v374 = vpop.permute.xlu0 %373
        %vm377 = vcmask 1044480
        %v378 = vrot.slane %v349, 3
        %v379 = vrot.slane %v345, 3
        %v380 = vsel %vm377, %v378, %v379
        %v381 = vrot.slane %v350, 3
        %v382 = vsel %vm377, %v379, %v381
        %383 = vrot.lane.b32.xlu0 %v380, 48
        %v384 = vpop.permute.xlu0 %383
        %385 = vrot.lane.b32.xlu0 %v382, 48
        %v386 = vpop.permute.xlu0 %385
        %vm389 = vcmask 1043456
        %v390 = vrot.slane %v349, 4
        %v391 = vrot.slane %v345, 4
        %v392 = vsel %vm389, %v390, %v391
        %v393 = vrot.slane %v350, 4
        %v394 = vsel %vm389, %v391, %v393
        %395 = vrot.lane.b32.xlu0 %v392, 64
        %v396 = vpop.permute.xlu0 %395
        %397 = vrot.lane.b32.xlu0 %v394, 64
        %v398 = vpop.permute.xlu0 %397
        %v401 = vrot.slane %v349, 5
        %v402 = vrot.slane %v345, 5
        %v403 = vsel %vm342, %v401, %v402
        %v404 = vrot.slane %v350, 5
        %v405 = vsel %vm342, %v402, %v404
        %406 = vrot.lane.b32.xlu0 %v403, 80
        %v407 = vpop.permute.xlu0 %406
        %408 = vrot.lane.b32.xlu0 %v405, 80
        %v409 = vpop.permute.xlu0 %408
        %vm412 = vcmask 1041408
        %v413 = vrot.slane %v349, 6
        %v414 = vrot.slane %v345, 6
        %v415 = vsel %vm412, %v413, %v414
        %v416 = vrot.slane %v350, 6
        %v417 = vsel %vm412, %v414, %v416
        %418 = vrot.lane.b32.xlu0 %v415, 96
        %v419 = vpop.permute.xlu0 %418
        %420 = vrot.lane.b32.xlu0 %v417, 96
        %v421 = vpop.permute.xlu0 %420
        %vm424 = vcmask 130048
        %v425 = vsel %vm424, %v349, %v360
        %v426 = vsel %vm424, %v345, %v362
        %vm427 = vcmask 261120
        %v428 = vsel %vm427, %v425, %v372
        %v429 = vsel %vm427, %v426, %v374
        %vm430 = vcmask 392192
        %v431 = vsel %vm430, %v428, %v384
        %v432 = vsel %vm430, %v429, %v386
        %vm433 = vcmask 523264
        %v434 = vsel %vm433, %v431, %v396
        %v435 = vsel %vm433, %v432, %v398
        %vm436 = vcmask 654336
        %v437 = vsel %vm436, %v434, %v407
        %v438 = vsel %vm436, %v435, %v409
        %vm439 = vcmask 785408
        %v440 = vsel %vm439, %v437, %v419
        %v441 = vsel %vm439, %v438, %v421
        %v442 = vld [vmem:[%s2] sm:$0xff]
        %v443 = vld [vmem:[%s2 + $0x8] sm:$0xff]
        %v444 = vld [vmem:[%s2 + $0x10] sm:$0xff]
        %v445 = vld [vmem:[%s2 + $0x18] sm:$0xff]
        %v446 = vld [vmem:[%s2 + $0x20] sm:$0xff]
        %v447 = vld [vmem:[%s2 + $0x28] sm:$0xff]
        %v448 = vld [vmem:[%s2 + $0x30] sm:$0xff]
        %v449 = vld [vmem:[%s2 + $0x38] sm:$0xff]
        %v450 = vld [vmem:[%s2 + $0x40] sm:$0xff]
        %v451 = vld [vmem:[%s2 + $0x48] sm:$0xff]
        %v452 = vld [vmem:[%s2 + $0x50] sm:$0xff]
        %v453 = vld [vmem:[%s2 + $0x58] sm:$0xff]
        %v454 = vld [vmem:[%s2 + $0x60] sm:$0xff]
        %v455 = vld [vmem:[%s2 + $0x68] sm:$0xff]
        %v456 = vld [vmem:[%s6] sm:$0x1]
        %v457 = vperm.slane %v456, 0
        %vm458 = vcmask 916480
        %v460 = vsel %vm458, %v440, 0
        %v463 = vsel %vm458, %v441, 0
        %465 = vmatpush.msra.mxu0 0.0
        %466 = vmatpush.msra.mxu0 0.0
        %467 = vmatpush.msra.mxu0 %v455
        %468 = vmatpush.msra.mxu0 %v454
        %469 = vmatpush.msra.mxu0 %v453
        %470 = vmatpush.msra.mxu0 %v452
        %471 = vmatpush.msra.mxu0 %v451
        %472 = vmatpush.msra.mxu0 %v450
        %473 = vmatpush.msra.mxu0 %v449
        %474 = vmatpush.msra.mxu0 %v448
        %475 = vmatpush.msra.mxu0 %v447
        %476 = vmatpush.msra.mxu0 %v446
        %477 = vmatpush.msra.mxu0 %v445
        %478 = vmatpush.msra.mxu0 %v444
        %479 = vmatpush.msra.mxu0 %v443
        %480 = vmatpush.msra.mxu0 %v442
        %481 = vmatmul.f32.gmra.mxu0 %v460
        %v482 = vpop.f32.mrf.mxu0
        %v483 = vadd.f32 %v457, %v482
        %484 = vmatmul.f32.gmra.mxu0 %v463
        %v485 = vpop.f32.mrf.mxu0
        %v486 = vadd.f32 %v457, %v485
        %487 = vdwg.mxu0
        %v488 = vmax.f32 %v483, 0.0
        %v489 = vmax.f32 %v486, 0.0
        %vm490 = vcmask 258048
        %v491 = vsel %vm490, %v488, -inf
        %v492 = vrot.slane %v491, 4
        %v493 = vmax.f32 %v491, %v492
        %v494 = vrot.slane %v493, 2
        %v495 = vmax.f32 %v493, %v494
        %v496 = vrot.slane %v495, 1
        %v497 = vmax.f32 %v495, %v496
        %vm498 = vcmask 261125
        %v499 = vsel %vm498, %v488, -inf
        %vm500 = vcmask 254976
        %v501 = vsel %vm500, %v489, -inf
        %v502 = vmax.f32 %v499, %v501
        %v503 = vrot.slane %v502, 4
        %v504 = vmax.f32 %v502, %v503
        %v505 = vrot.slane %v504, 2
        %v506 = vmax.f32 %v504, %v505
        %v507 = vrot.slane %v506, 1
        %v508 = vmax.f32 %v506, %v507
        %vm509 = vcmask 260098
        %v510 = vsel %vm509, %v489, -inf
        %v511 = vrot.slane %v510, 4
        %v512 = vmax.f32 %v510, %v511
        %v513 = vrot.slane %v512, 2
        %v514 = vmax.f32 %v512, %v513
        %v515 = vrot.slane %v514, 1
        %v516 = vmax.f32 %v514, %v515
        %v518 = vrot.slane %v489, 4
        %vm520 = vcmask 1040384
        %v521 = vsel %vm520, %v497, %v508
        %v522 = vsel %vm412, %v521, %v516
        %v523 = vsel %vm342, %v522, %v518
        %v524 = vld [vmem:[%s3] sm:$0xff]
        %v525 = vld [vmem:[%s3 + $0x8] sm:$0xff]
        %v526 = vld [vmem:[%s3 + $0x10] sm:$0xff]
        %v527 = vld [vmem:[%s3 + $0x18] sm:$0xff]
        %v528 = vld [vmem:[%s7] sm:$0x1]
        %v529 = vperm.slane %v528, 0
        %v531 = vsel %vm427, %v523, 0
        %533 = vmatpush.msra.mxu0 0.0
        %534 = vmatpush.msra.mxu0 0.0
        %535 = vmatpush.msra.mxu0 0.0
        %536 = vmatpush.msra.mxu0 0.0
        %537 = vmatpush.msra.mxu0 0.0
        %538 = vmatpush.msra.mxu0 0.0
        %539 = vmatpush.msra.mxu0 0.0
        %540 = vmatpush.msra.mxu0 0.0
        %541 = vmatpush.msra.mxu0 0.0
        %542 = vmatpush.msra.mxu0 0.0
        %543 = vmatpush.msra.mxu0 0.0
        %544 = vmatpush.msra.mxu0 0.0
        %545 = vmatpush.msra.mxu0 %v527
        %546 = vmatpush.msra.mxu0 %v526
        %547 = vmatpush.msra.mxu0 %v525
        %548 = vmatpush.msra.mxu0 %v524
        %549 = vmatmul.f32.gmra.mxu0 %v531
        %v550 = vpop.f32.mrf.mxu0
        %v551 = vadd.f32 %v529, %v550
        %552 = vdwg.mxu0
        %v553 = vmax.f32 %v551, 0.0
        %v554 = vxor.u32 %v551, 2147483648
        %v555 = vmul.f32 %v554, 1.442695
        %v556 = vpow.pop %v555
        %v557 = vadd.f32 %v556, 1.0
        %v558 = vrcp.pop %v557
        %v559 = vmul.f32 %v557, %v558
        %v560 = vsub.f32 1.0, %v559
        %v561 = vmul.f32 %v558, %v560
        %v562 = vadd.f32 %v558, %v561
        %vm563 = vweird.f32 %v557
        %vm564 = vweird.f32 %v558
        %vm565 = vmor %vm563, %vm564
        %v566 = vsel %vm565, %v558, %v562
        %v567 = vand.u32 2147483647, %v557
        %vm568 = vcmp.eq.f32.partialorder %v567, 8.507059e+37
        %v569 = vand.u32 %v557, 2147483648
        %v570 = vor.u32 1.1754944e-38, %v569
        %v571 = vsel %vm568, %v570, %v566
        %v572 = vmul.f32 1.0, %v571
        %574 = vrot.lane.b32.xlu0 %v553, 32
        %v575 = vpop.permute.xlu0 %574
        %v577 = vmul.f32 %v572, %v575
        %v578 = vsub.f32 1.0, %v572
        %579 = vrot.lane.b32.xlu0 %v523, 32
        %v580 = vpop.permute.xlu0 %579
        %v582 = vmul.f32 %v578, %v580
        %v583 = vadd.f32 %v577, %v582
        %s584 = scalar_lea.vmem %s3, 32
        %v585 = vld [vmem:[%s584] sm:$0xff]
        %v586 = vld [vmem:[%s584 + $0x8] sm:$0xff]
        %v587 = vld [vmem:[%s584 + $0x10] sm:$0xff]
        %v588 = vld [vmem:[%s584 + $0x18] sm:$0xff]
        %v589 = vld [vmem:[%s7 + $0x1] sm:$0x1]
        %v590 = vperm.slane %v589, 0
        %592 = vrot.lane.b32.xlu0 %v583, 96
        %v593 = vpop.permute.xlu0 %592
        %v594 = vsel %vm427, %v593, 0
        %596 = vmatpush.msra.mxu0 0.0
        %597 = vmatpush.msra.mxu0 0.0
        %598 = vmatpush.msra.mxu0 0.0
        %599 = vmatpush.msra.mxu0 0.0
        %600 = vmatpush.msra.mxu0 0.0
        %601 = vmatpush.msra.mxu0 0.0
        %602 = vmatpush.msra.mxu0 0.0
        %603 = vmatpush.msra.mxu0 0.0
        %604 = vmatpush.msra.mxu0 0.0
        %605 = vmatpush.msra.mxu0 0.0
        %606 = vmatpush.msra.mxu0 0.0
        %607 = vmatpush.msra.mxu0 0.0
        %608 = vmatpush.msra.mxu0 %v588
        %609 = vmatpush.msra.mxu0 %v587
        %610 = vmatpush.msra.mxu0 %v586
        %611 = vmatpush.msra.mxu0 %v585
        %612 = vmatmul.f32.gmra.mxu0 %v594
        %v613 = vpop.f32.mrf.mxu0
        %v614 = vadd.f32 %v590, %v613
        %615 = vdwg.mxu0
        %v616 = vmax.f32 %v614, 0.0
        %v617 = vxor.u32 %v614, 2147483648
        %v618 = vmul.f32 %v617, 1.442695
        %v619 = vpow.pop %v618
        %v620 = vadd.f32 %v619, 1.0
        %v621 = vrcp.pop %v620
        %v622 = vmul.f32 %v620, %v621
        %v623 = vsub.f32 1.0, %v622
        %v624 = vmul.f32 %v621, %v623
        %v625 = vadd.f32 %v621, %v624
        %vm626 = vweird.f32 %v620
        %vm627 = vweird.f32 %v621
        %vm628 = vmor %vm626, %vm627
        %v629 = vsel %vm628, %v621, %v625
        %v630 = vand.u32 2147483647, %v620
        %vm631 = vcmp.eq.f32.partialorder %v630, 8.507059e+37
        %v632 = vand.u32 %v620, 2147483648
        %v633 = vor.u32 1.1754944e-38, %v632
        %v634 = vsel %vm631, %v633, %v629
        %v635 = vmul.f32 1.0, %v634
        %637 = vrot.lane.b32.xlu0 %v616, 32
        %v638 = vpop.permute.xlu0 %637
        %v640 = vmul.f32 %v635, %v638
        %v641 = vsub.f32 1.0, %v635
        %v642 = vmul.f32 %v641, %v583
        %v643 = vadd.f32 %v640, %v642
        %v644 = vmax.f32 %v643, 0.0
        %v645 = vld [vmem:[%s6 + $0x1] sm:$0x1]
        %v646 = vld [vmem:[%s6 + $0x2] sm:$0x1]
        %648 = vrot.lane.b32.xlu0 %v644, 96
        %v649 = vpop.permute.xlu0 %648
        %vm651 = vcmask 257024
        %v652 = vsel %vm651, %v649, 0.0
        %653 = vadd.xlane.f32.xlu0 %v652
        %v654 = vpop.xlane.xlu0 %653
        %v655 = vrcp.pop 32.0
        %v656 = vmul.f32 32.0, %v655
        %v657 = vsub.f32 1.0, %v656
        %v658 = vmul.f32 %v655, %v657
        %v659 = vadd.f32 %v655, %v658
        %vm660 = vweird.f32 %v655
        %v661 = vsel %vm660, %v655, %v659
        %v662 = vmul.f32 %v654, %v661
        %v663 = vsub.f32 %v644, %v662
        %v664 = vmul.f32 %v663, %v663
        %666 = vrot.lane.b32.xlu0 %v664, 96
        %v667 = vpop.permute.xlu0 %666
        %v669 = vsel %vm651, %v667, 0.0
        %670 = vadd.xlane.f32.xlu0 %v669
        %v671 = vpop.xlane.xlu0 %670
        %v672 = vmul.f32 %v671, %v661
        %v673 = vadd.f32 %v672, 1e-05
        %v674 = vrsqrt.pop %v673
        %v675 = vmul.f32 %v674, %v673
        %v676 = vmul.f32 %v675, %v674
        %v677 = vmul.f32 0.5, %v676
        %v678 = vsub.f32 1.5, %v677
        %v679 = vmul.f32 %v674, %v678
        %vm680 = vweird.f32 %v673
        %vm681 = vweird.f32 %v674
        %vm682 = vmor %vm680, %vm681
        %v683 = vsel %vm682, %v674, %v679
        %v684 = vmul.f32 %v663, %v683
        %v685 = vperm.slane %v645, 0
        %687 = vrot.lane.b32.xlu0 %v685, 32
        %v688 = vpop.permute.xlu0 %687
        %v690 = vmul.f32 %v684, %v688
        %v691 = vperm.slane %v646, 0
        %693 = vrot.lane.b32.xlu0 %v691, 32
        %v694 = vpop.permute.xlu0 %693
        %v696 = vadd.f32 %v690, %v694
        %v697 = vld [vmem:[%s4] sm:$0xff]
        %v698 = vld [vmem:[%s4 + $0x8] sm:$0xff]
        %v699 = vld [vmem:[%s4 + $0x10] sm:$0xff]
        %v700 = vld [vmem:[%s4 + $0x18] sm:$0xff]
        %v701 = vld [vmem:[%s7 + $0x2] sm:$0x1]
        %v702 = vperm.slane %v701, 0
        %704 = vrot.lane.b32.xlu0 %v696, 96
        %v705 = vpop.permute.xlu0 %704
        %v706 = vsel %vm427, %v705, 0
        %708 = vmatpush.msra.mxu0 0.0
        %709 = vmatpush.msra.mxu0 0.0
        %710 = vmatpush.msra.mxu0 0.0
        %711 = vmatpush.msra.mxu0 0.0
        %712 = vmatpush.msra.mxu0 0.0
        %713 = vmatpush.msra.mxu0 0.0
        %714 = vmatpush.msra.mxu0 0.0
        %715 = vmatpush.msra.mxu0 0.0
        %716 = vmatpush.msra.mxu0 0.0
        %717 = vmatpush.msra.mxu0 0.0
        %718 = vmatpush.msra.mxu0 0.0
        %719 = vmatpush.msra.mxu0 0.0
        %720 = vmatpush.msra.mxu0 %v700
        %721 = vmatpush.msra.mxu0 %v699
        %722 = vmatpush.msra.mxu0 %v698
        %723 = vmatpush.msra.mxu0 %v697
        %724 = vmatmul.f32.gmra.mxu0 %v706
        %v725 = vpop.f32.mrf.mxu0
        %v726 = vadd.f32 %v702, %v725
        %727 = vdwg.mxu0
        %v728 = vmax.f32 %v726, 0.0
        %v729 = vld [vmem:[%s5] sm:$0xff]
        %v730 = vld [vmem:[%s5 + $0x8] sm:$0xff]
        %v731 = vld [vmem:[%s5 + $0x10] sm:$0xff]
        %v732 = vld [vmem:[%s5 + $0x18] sm:$0xff]
        %v733 = vld [vmem:[%s5 + $0x20] sm:$0xff]
        %v734 = vld [vmem:[%s5 + $0x28] sm:$0xff]
        %v735 = vld [vmem:[%s5 + $0x30] sm:$0xff]
        %v736 = vld [vmem:[%s5 + $0x38] sm:$0xff]
        %v737 = vld [vmem:[%s6 + $0x3] sm:$0x1]
        %v738 = vperm.slane %v737, 0
        %v740 = vsel %vm433, %v728, 0
        %742 = vmatpush.msra.mxu0 0.0
        %743 = vmatpush.msra.mxu0 0.0
        %744 = vmatpush.msra.mxu0 0.0
        %745 = vmatpush.msra.mxu0 0.0
        %746 = vmatpush.msra.mxu0 0.0
        %747 = vmatpush.msra.mxu0 0.0
        %748 = vmatpush.msra.mxu0 0.0
        %749 = vmatpush.msra.mxu0 0.0
        %750 = vmatpush.msra.mxu0 %v736
        %751 = vmatpush.msra.mxu0 %v735
        %752 = vmatpush.msra.mxu0 %v734
        %753 = vmatpush.msra.mxu0 %v733
        %754 = vmatpush.msra.mxu0 %v732
        %755 = vmatpush.msra.mxu0 %v731
        %756 = vmatpush.msra.mxu0 %v730
        %757 = vmatpush.msra.mxu0 %v729
        %758 = vmatmul.f32.gmra.mxu0 %v740
        %v759 = vpop.f32.mrf.mxu0
        %v760 = vadd.f32 %v738, %v759
        %761 = vdwg.mxu0
        %v763 = vadd.f32 %v760, %v705
        %v764 = vld [vmem:[%s6 + $0x4] sm:$0x1]
        %v765 = vld [vmem:[%s6 + $0x5] sm:$0x1]
        %v766 = vsel %vm651, %v763, 0.0
        %767 = vadd.xlane.f32.xlu0 %v766
        %v768 = vpop.xlane.xlu0 %767
        %v769 = vmul.f32 %v768, %v661
        %v770 = vsub.f32 %v763, %v769
        %v771 = vmul.f32 %v770, %v770
        %v772 = vsel %vm651, %v771, 0.0
        %773 = vadd.xlane.f32.xlu0 %v772
        %v774 = vpop.xlane.xlu0 %773
        %v775 = vmul.f32 %v774, %v661
        %v776 = vadd.f32 %v775, 1e-05
        %v777 = vrsqrt.pop %v776
        %v778 = vmul.f32 %v777, %v776
        %v779 = vmul.f32 %v778, %v777
        %v780 = vmul.f32 0.5, %v779
        %v781 = vsub.f32 1.5, %v780
        %v782 = vmul.f32 %v777, %v781
        %vm783 = vweird.f32 %v776
        %vm784 = vweird.f32 %v777
        %vm785 = vmor %vm783, %vm784
        %v786 = vsel %vm785, %v777, %v782
        %v787 = vmul.f32 %v770, %v786
        %v788 = vperm.slane %v764, 0
        %v789 = vmul.f32 %v787, %v788
        %v790 = vperm.slane %v765, 0
        %v791 = vadd.f32 %v789, %v790
        %s792 = scalar_lea.vmem %s4, 32
        %v793 = vld [vmem:[%s792] sm:$0xff]
        %v794 = vld [vmem:[%s792 + $0x8] sm:$0xff]
        %v795 = vld [vmem:[%s792 + $0x10] sm:$0xff]
        %v796 = vld [vmem:[%s792 + $0x18] sm:$0xff]
        %v797 = vld [vmem:[%s7 + $0x3] sm:$0x1]
        %v798 = vperm.slane %v797, 0
        %v800 = vsel %vm427, %v791, 0
        %802 = vmatpush.msra.mxu0 0.0
        %803 = vmatpush.msra.mxu0 0.0
        %804 = vmatpush.msra.mxu0 0.0
        %805 = vmatpush.msra.mxu0 0.0
        %806 = vmatpush.msra.mxu0 0.0
        %807 = vmatpush.msra.mxu0 0.0
        %808 = vmatpush.msra.mxu0 0.0
        %809 = vmatpush.msra.mxu0 0.0
        %810 = vmatpush.msra.mxu0 0.0
        %811 = vmatpush.msra.mxu0 0.0
        %812 = vmatpush.msra.mxu0 0.0
        %813 = vmatpush.msra.mxu0 0.0
        %814 = vmatpush.msra.mxu0 %v796
        %815 = vmatpush.msra.mxu0 %v795
        %816 = vmatpush.msra.mxu0 %v794
        %817 = vmatpush.msra.mxu0 %v793
        %818 = vmatmul.f32.gmra.mxu0 %v800
        %v819 = vpop.f32.mrf.mxu0
        %v820 = vadd.f32 %v798, %v819
        %821 = vdwg.mxu0
        %v822 = vmax.f32 %v820, 0.0
        %s823 = scalar_lea.vmem %s5, 64
        %v824 = vld [vmem:[%s823] sm:$0xff]
        %v825 = vld [vmem:[%s823 + $0x8] sm:$0xff]
        %v826 = vld [vmem:[%s823 + $0x10] sm:$0xff]
        %v827 = vld [vmem:[%s823 + $0x18] sm:$0xff]
        %v828 = vld [vmem:[%s823 + $0x20] sm:$0xff]
        %v829 = vld [vmem:[%s823 + $0x28] sm:$0xff]
        %v830 = vld [vmem:[%s823 + $0x30] sm:$0xff]
        %v831 = vld [vmem:[%s823 + $0x38] sm:$0xff]
        %v832 = vld [vmem:[%s6 + $0x6] sm:$0x1]
        %v833 = vperm.slane %v832, 0
        %v835 = vsel %vm433, %v822, 0
        %837 = vmatpush.msra.mxu0 0.0
        %838 = vmatpush.msra.mxu0 0.0
        %839 = vmatpush.msra.mxu0 0.0
        %840 = vmatpush.msra.mxu0 0.0
        %841 = vmatpush.msra.mxu0 0.0
        %842 = vmatpush.msra.mxu0 0.0
        %843 = vmatpush.msra.mxu0 0.0
        %844 = vmatpush.msra.mxu0 0.0
        %845 = vmatpush.msra.mxu0 %v831
        %846 = vmatpush.msra.mxu0 %v830
        %847 = vmatpush.msra.mxu0 %v829
        %848 = vmatpush.msra.mxu0 %v828
        %849 = vmatpush.msra.mxu0 %v827
        %850 = vmatpush.msra.mxu0 %v826
        %851 = vmatpush.msra.mxu0 %v825
        %852 = vmatpush.msra.mxu0 %v824
        %853 = vmatmul.f32.gmra.mxu0 %v835
        %v854 = vpop.f32.mrf.mxu0
        %v855 = vadd.f32 %v833, %v854
        %856 = vdwg.mxu0
        %v857 = vadd.f32 %v855, %v791
        %v858 = vld [vmem:[%s6 + $0x7] sm:$0x1]
        %v859 = vld [vmem:[%s6 + $0x8] sm:$0x1]
        %v860 = vsel %vm651, %v857, 0.0
        %861 = vadd.xlane.f32.xlu0 %v860
        %v862 = vpop.xlane.xlu0 %861
        %v863 = vmul.f32 %v862, %v661
        %v864 = vsub.f32 %v857, %v863
        %v865 = vmul.f32 %v864, %v864
        %v866 = vsel %vm651, %v865, 0.0
        %867 = vadd.xlane.f32.xlu0 %v866
        %v868 = vpop.xlane.xlu0 %867
        %v869 = vmul.f32 %v868, %v661
        %v870 = vadd.f32 %v869, 1e-05
        %v871 = vrsqrt.pop %v870
        %v872 = vmul.f32 %v871, %v870
        %v873 = vmul.f32 %v872, %v871
        %v874 = vmul.f32 0.5, %v873
        %v875 = vsub.f32 1.5, %v874
        %v876 = vmul.f32 %v871, %v875
        %vm877 = vweird.f32 %v870
        %vm878 = vweird.f32 %v871
        %vm879 = vmor %vm877, %vm878
        %v880 = vsel %vm879, %v871, %v876
        %v881 = vmul.f32 %v864, %v880
        %v882 = vperm.slane %v858, 0
        %v883 = vmul.f32 %v881, %v882
        %v884 = vperm.slane %v859, 0
        %v885 = vadd.f32 %v883, %v884
        %886 = vst.msk [vmem:[%s313] sm:$0xf] %vm651, %v885
        %s887 = sand.u32 %s208, 1
        %s888 = scalar_lea.sflag [#allocation3], %s887
        %s889 = sand.u32 %s208, 1
        %s890 = smul.addr %s889, 4
        %s891 = scalar_lea.vmem [#allocation2], %s890
        // Predicated region
        $region53: #{lee_style_char_proc.1} parent=51 // pred_check
          %p892 = pneg %p218
        $region54: #{lee_style_char_proc.1} parent=51 // pred_check_branch
          %894 = sbr.rel (%p892) target = $region56
        $region55: #{lee_style_char_proc.1} parent=51 // pred_region
          %896 = vsyncadd %s888, 0
          %s897 = smul.addr %s22, 4
          %s898 = scalar_lea.hbm %s8, %s897
          %s900 = sshll.u32 %s891, 4
          %s901 = int_to_ptr.vmem [resolvable:$true] %s900
          %s902 = sshll.u32 %s898, 4
          %s903 = int_to_ptr.hbm [resolvable:$true] %s902
          %905 = dma.vmem_to_hbm [thread:$0]  %s901, 64, %s903, %s888
        $region56: #{lee_style_char_proc.1} parent=51 // pred_fallthru
          _
      $region52: #{lee_style_char_proc.1} parent=5 // pred_fallthru
        _
      %p906 = scmp.le.s32.totalorder 2, %s17
      // Predicated region
      $region57: #{lee_style_char_proc.1} parent=5 // pred_check
        %p907 = pneg %p906
      $region58: #{lee_style_char_proc.1} parent=5 // pred_check_branch
        %909 = sbr.rel (%p907) target = $region60
      $region59: #{lee_style_char_proc.1} parent=5 // pred_region
        %s910 = ssub.s32 %s17, 2
        // Predicated region
        $region61: #{lee_style_char_proc.1} parent=59 // pred_check
          %p911 = pneg %p224
        $region62: #{lee_style_char_proc.1} parent=59 // pred_check_branch
          %913 = sbr.rel (%p911) target = $region64
        $region63: #{lee_style_char_proc.1} parent=59 // pred_region
          %s914 = sand.u32 %s209, 1
          %s915 = scalar_lea.sflag [#allocation3], %s914
          %s916 = sand.u32 %s209, 1
          %s917 = smul.addr %s916, 4
          %s918 = scalar_lea.vmem [#allocation2], %s917
          %920 = dma.done %s915, 64
        $region64: #{lee_style_char_proc.1} parent=59 // pred_fallthru
          _
      $region60: #{lee_style_char_proc.1} parent=5 // pred_fallthru
        _
    $region6: #{lee_style_char_proc.1} parent=1 // loop_footer
      %s21 = sadd.s32 1, %s17
    $region7: #{lee_style_char_proc.1} parent=1 // loop_footer_branch
      %16 = sbr.rel target = $region3
    $region8: #{lee_style_char_proc.1} parent=1 // loop_exit
      _
    %921 = vsyncpa [#allocation3], 1
    %s922 = scalar_lea.sflag [#allocation3], 1
    %923 = vsyncpa %s922, 1

</llo_original>
